<compile_context>
chip_gen: v7x
topology: tpu7x:2x2x1
jax: 0.10.0
libtpu: 0.0.40
codegen_flags: <defaults>
</compile_context>

<pallas_src>
import jax
import jax.numpy as jnp
from jax import lax
from jax.experimental import pallas as pl
from jax.experimental.pallas import tpu as pltpu

LANE = 128


def _round_up(x, m):
    return ((x + m - 1) // m) * m


def mlp_kernel(x_ref, w1_ref, b1_ref, w2_ref, b2_ref, w34t_ref, b34t_ref, o_ref):
    cdt = w1_ref.dtype  # MXU operand dtype (f32 default; bf16 optional)
    # fc1 + ReLU (MXU accumulates in f32; bias/ReLU on the f32 VPU path)
    h = jnp.dot(x_ref[...].astype(cdt), w1_ref[...],
                preferred_element_type=jnp.float32)
    h = jnp.maximum(h + b1_ref[...], 0.0)
    # (dropout p=0.05: identity at inference)
    # fc2 + ReLU
    h = jnp.dot(h.astype(cdt), w2_ref[...], preferred_element_type=jnp.float32)
    h = jnp.maximum(h + b2_ref[...], 0.0)
    # fc3+fc4 folded into one matmul; emitted transposed (out_pad, tb) so the batch
    # axis lands on the lane axis -> lane-dense, unmasked output stores.
    out_t = lax.dot_general(
        w34t_ref[...], h.astype(cdt),
        dimension_numbers=(((1,), (1,)), ((), ())),
        preferred_element_type=jnp.float32)
    o_ref[...] = (out_t + b34t_ref[...]).astype(o_ref.dtype)


def _prepare_kernel_params(params, compute_dtype):
    """Fold fc3 into fc4 (in f32), pad the head to 8 sublanes, cast MXU operands."""
    hidden = params["w1"].shape[1]
    out_size = params["w4"].shape[1]
    out_pad = _round_up(out_size, 8)
    f32 = jnp.float32

    w3 = params["w3"].astype(f32)
    w4 = params["w4"].astype(f32)
    # fc4(fc3(h)) = h @ (w3 @ w4) + (b3 @ w4 + b4)   (dropout identity at inference)
    w34 = w3 @ w4                                                    # (hidden, out)
    b34 = params["b3"].astype(f32) @ w4 + params["b4"].astype(f32)   # (1, out)

    w34t = jnp.zeros((out_pad, hidden), f32).at[:out_size, :].set(w34.T)
    b34t = jnp.zeros((out_pad, 1), f32).at[:out_size, :].set(b34.T)

    kp = dict(
        w1=params["w1"].astype(compute_dtype),
        b1=params["b1"].astype(f32),
        w2=params["w2"].astype(compute_dtype),
        b2=params["b2"].astype(f32),
        w34t=w34t.astype(compute_dtype),
        b34t=b34t,  # f32
    )
    return kp, out_pad, out_size, hidden


def _padded_bytes_f32(a):
    """Conservative VMEM footprint of a 2D param: sublane->8, lane->128, 4 B/elem."""
    r, c = a.shape
    return _round_up(r, 8) * _round_up(c, LANE) * 4


def mlp_forward(x, params, *, compute_dtype=jnp.float32, max_batch_tile=8192):
    """Inference forward pass. x: (B, input_size) -> (B, output_size) float32."""
    kp, out_pad, out_size, hidden = _prepare_kernel_params(params, compute_dtype)
    in_size = params["w1"].shape[0]
    B = x.shape[0]
    row_mult = 16 if jnp.dtype(compute_dtype) == jnp.dtype(jnp.bfloat16) else 8

    if B <= LANE:
        # Single tile; the transposed output block spans the full (tiny) batch extent.
        tb = _round_up(B, row_mult)
    else:
        # >=2 grid steps (keeps both v7x TensorCores busy). tb is a multiple of 128 so
        # the transposed output block stays lane-dense (unmasked vst) on every step.
        tb = min(max_batch_tile, _round_up(pl.cdiv(B, 2), LANE))
        tb = _round_up(max(tb, LANE), LANE)
    b_pad = _round_up(B, tb)

    # Only pad batch rows; never the feature axis, never an extra cast pass over x.
    x_in = x if b_pad == B else jnp.pad(x, ((0, b_pad - B), (0, 0)))

    grid = (b_pad // tb,)
    const = lambda i: (0, 0)  # weights/biases: VMEM-resident across all grid steps
    in_specs = [
        pl.BlockSpec((tb, in_size), lambda i: (i, 0)),   # x: streamed per batch tile
        pl.BlockSpec((in_size, hidden), const),          # w1
        pl.BlockSpec((1, hidden), const),                # b1
        pl.BlockSpec((hidden, hidden), const),           # w2
        pl.BlockSpec((1, hidden), const),                # b2
        pl.BlockSpec((out_pad, hidden), const),          # w34^T (fc3·fc4 folded)
        pl.BlockSpec((out_pad, 1), const),               # b34^T
    ]
    out_specs = pl.BlockSpec((out_pad, tb), lambda i: (0, i))
    args = (x_in, kp["w1"], kp["b1"], kp["w2"], kp["b2"], kp["w34t"], kp["b34t"])

    # VMEM budget with lane padding accounted for (v7x's 64 MiB/TC is the binding
    # case): x tile (tb, in_size) and the hidden intermediates (tb, hidden) both
    # occupy (tb, 128) lanes in VMEM; double-buffered x/out tiles + params + headroom.
    x_item = jnp.dtype(x.dtype).itemsize
    x_tile_bytes = tb * LANE * x_item
    out_tile_bytes = out_pad * _round_up(tb, LANE) * 4
    interm_bytes = 3 * tb * LANE * 4
    param_bytes = sum(_padded_bytes_f32(a) for a in args[1:])
    vmem_limit = int(2 * (x_tile_bytes + out_tile_bytes) + 2 * param_bytes
                     + interm_bytes + (2 << 20))
    vmem_limit = max(8 << 20, min(vmem_limit, 128 << 20))

    flops = 2 * b_pad * (in_size * hidden + hidden * hidden + hidden * out_pad)
    bytes_accessed = int(b_pad * in_size * x_item + out_pad * b_pad * 4
                         + sum(int(a.size) * a.dtype.itemsize for a in args[1:]))
    cost = pl.CostEstimate(flops=flops, transcendentals=0,
                           bytes_accessed=bytes_accessed)

    out_t = pl.pallas_call(
        mlp_kernel,
        out_shape=jax.ShapeDtypeStruct((out_pad, b_pad), jnp.float32),
        grid=grid,
        in_specs=in_specs,
        out_specs=out_specs,
        compiler_params=pltpu.CompilerParams(
            dimension_semantics=("parallel",),   # shard batch tiles over v7x's 2 TCs
            vmem_limit_bytes=vmem_limit),
        cost_estimate=cost,
    )(*args)

    # Tiny (out_pad, b_pad) slab -> slice + transpose back to (B, out_size).
    return out_t[:out_size, :B].T


def init_params(key, input_size=5, output_size=3, hidden_size=32):
    """Deterministic synthetic init mirroring nn.Linear shapes (stored as (in, out))."""
    sizes = [(input_size, hidden_size),
             (hidden_size, hidden_size),
             (hidden_size, hidden_size),
             (hidden_size, output_size)]
    params = {}
    for i, (fan_in, fan_out) in enumerate(sizes, start=1):
        key, kw, kb = jax.random.split(key, 3)
        bound = 1.0 / float(fan_in) ** 0.5
        params[f"w{i}"] = jax.random.uniform(
            kw, (fan_in, fan_out), jnp.float32, -bound, bound)
        params[f"b{i}"] = jax.random.uniform(
            kb, (1, fan_out), jnp.float32, -bound, bound)
    return params


def mlp_reference(x, p):
    h = jnp.maximum(x @ p["w1"] + p["b1"], 0.0)
    h = jnp.maximum(h @ p["w2"] + p["b2"], 0.0)
    h = h @ p["w3"] + p["b3"]
    return h @ p["w4"] + p["b4"]


if __name__ == "__main__":
    key = jax.random.PRNGKey(0)
    key, kx, kx2 = jax.random.split(key, 3)

    B, INPUT, OUTPUT, HIDDEN = 8, 5, 3, 32
    params = init_params(key, INPUT, OUTPUT, HIDDEN)

    # Small batch: single-tile path, f32 operands, strict check vs f32 reference
    # (also validates the fc3->fc4 fold numerically).
    x = jax.random.normal(kx, (B, INPUT), jnp.float32)
    ref = mlp_reference(x, params)
    out = jax.block_until_ready(mlp_forward(x, params))
    assert out.shape == (B, OUTPUT)
    assert jnp.allclose(out, ref, atol=1e-4, rtol=1e-4)

    # Larger batch: multi-tile path (grid >= 2, lane-dense transposed stores,
    # batch-row padding since 300 % 256 != 0).
    B2 = 300
    x2 = jax.random.normal(kx2, (B2, INPUT), jnp.float32)
    ref2 = mlp_reference(x2, params)
    out2 = jax.block_until_ready(mlp_forward(x2, params))
    assert out2.shape == (B2, OUTPUT)
    assert jnp.allclose(out2, ref2, atol=1e-4, rtol=1e-4)

    # Optional bf16 MXU-operand path (v6e/v7x); accumulation / bias / ReLU stay f32.
    out_bf16 = jax.block_until_ready(
        mlp_forward(x, params, compute_dtype=jnp.bfloat16))
    assert out_bf16.shape == (B, OUTPUT)
    assert jnp.allclose(out_bf16, ref, atol=1e-1, rtol=1e-1)

    print("KERNEL_OK")
</pallas_src>

<mosaic_0001>
module attributes {stable_mosaic.version = 11 : i64} {
  func.func @mlp_kernel(%arg0: i32, %arg1: memref<8x5xf32, #tpu.memory_space<vmem>>, %arg2: memref<5x32xf32, #tpu.memory_space<vmem>>, %arg3: memref<1x32xf32, #tpu.memory_space<vmem>>, %arg4: memref<32x32xf32, #tpu.memory_space<vmem>>, %arg5: memref<1x32xf32, #tpu.memory_space<vmem>>, %arg6: memref<8x32xf32, #tpu.memory_space<vmem>>, %arg7: memref<8x1xf32, #tpu.memory_space<vmem>>, %arg8: memref<8x8xf32, #tpu.memory_space<vmem>>) attributes {dimension_semantics = [#tpu.dimension_semantics<parallel>], iteration_bounds = array<i64: 1>, scalar_prefetch = 0 : i64, scratch_operands = 0 : i64, tpu.core_type = #tpu.core_type<tc>, window_params = [{transform_indices = @transform_0, window_bounds = array<i64: 8, 5>}, {pipeline_mode = #tpu.pipeline_mode<synchronous>, transform_indices = @transform_1, window_bounds = array<i64: 5, 32>}, {pipeline_mode = #tpu.pipeline_mode<synchronous>, transform_indices = @transform_2, window_bounds = array<i64: 1, 32>}, {pipeline_mode = #tpu.pipeline_mode<synchronous>, transform_indices = @transform_3, window_bounds = array<i64: 32, 32>}, {pipeline_mode = #tpu.pipeline_mode<synchronous>, transform_indices = @transform_4, window_bounds = array<i64: 1, 32>}, {pipeline_mode = #tpu.pipeline_mode<synchronous>, transform_indices = @transform_5, window_bounds = array<i64: 8, 32>}, {pipeline_mode = #tpu.pipeline_mode<synchronous>, transform_indices = @transform_6, window_bounds = array<i64: 8, 1>}, {transform_indices = @transform_7, window_bounds = array<i64: 8, 8>}]} {
    %c0 = arith.constant 0 : index
    %c0_0 = arith.constant 0 : index
    %0 = vector.load %arg1[%c0, %c0_0] : memref<8x5xf32, #tpu.memory_space<vmem>>, vector<8x5xf32>
    %c0_1 = arith.constant 0 : index
    %c0_2 = arith.constant 0 : index
    %1 = vector.load %arg2[%c0_1, %c0_2] : memref<5x32xf32, #tpu.memory_space<vmem>>, vector<5x32xf32>
    %cst = arith.constant dense<0.000000e+00> : vector<8x32xf32>
    %2 = tpu.matmul %0, %1, %cst {dimension_numbers = #tpu.dot_dimension_numbers<[1], [0], [0], [1], [0, 0, 1, 1], [], []>} : vector<8x5xf32>, vector<5x32xf32>, vector<8x32xf32> -> vector<8x32xf32>
    %c0_3 = arith.constant 0 : index
    %c0_4 = arith.constant 0 : index
    %3 = vector.load %arg3[%c0_3, %c0_4] : memref<1x32xf32, #tpu.memory_space<vmem>>, vector<1x32xf32>
    %4 = vector.broadcast %3 : vector<1x32xf32> to vector<8x32xf32>
    %5 = arith.addf %2, %4 : vector<8x32xf32>
    %cst_5 = arith.constant 0.000000e+00 : f32
    %6 = vector.broadcast %cst_5 : f32 to vector<8x32xf32>
    %7 = arith.maximumf %5, %6 : vector<8x32xf32>
    %c0_6 = arith.constant 0 : index
    %c0_7 = arith.constant 0 : index
    %8 = vector.load %arg4[%c0_6, %c0_7] : memref<32x32xf32, #tpu.memory_space<vmem>>, vector<32x32xf32>
    %cst_8 = arith.constant dense<0.000000e+00> : vector<8x32xf32>
    %9 = tpu.matmul %7, %8, %cst_8 {dimension_numbers = #tpu.dot_dimension_numbers<[1], [0], [0], [1], [0, 0, 1, 1], [], []>} : vector<8x32xf32>, vector<32x32xf32>, vector<8x32xf32> -> vector<8x32xf32>
    %c0_9 = arith.constant 0 : index
    %c0_10 = arith.constant 0 : index
    %10 = vector.load %arg5[%c0_9, %c0_10] : memref<1x32xf32, #tpu.memory_space<vmem>>, vector<1x32xf32>
    %11 = vector.broadcast %10 : vector<1x32xf32> to vector<8x32xf32>
    %12 = arith.addf %9, %11 : vector<8x32xf32>
    %cst_11 = arith.constant 0.000000e+00 : f32
    %13 = vector.broadcast %cst_11 : f32 to vector<8x32xf32>
    %14 = arith.maximumf %12, %13 : vector<8x32xf32>
    %c0_12 = arith.constant 0 : index
    %c0_13 = arith.constant 0 : index
    %15 = vector.load %arg6[%c0_12, %c0_13] : memref<8x32xf32, #tpu.memory_space<vmem>>, vector<8x32xf32>
    %cst_14 = arith.constant dense<0.000000e+00> : vector<8x8xf32>
    %16 = tpu.matmul %15, %14, %cst_14 {dimension_numbers = #tpu.dot_dimension_numbers<[1], [1], [0], [0], [0, 0, 1, 0], [], []>} : vector<8x32xf32>, vector<8x32xf32>, vector<8x8xf32> -> vector<8x8xf32>
    %c0_15 = arith.constant 0 : index
    %c0_16 = arith.constant 0 : index
    %17 = vector.load %arg7[%c0_15, %c0_16] : memref<8x1xf32, #tpu.memory_space<vmem>>, vector<8x1xf32>
    %18 = vector.broadcast %17 : vector<8x1xf32> to vector<8x8xf32>
    %19 = arith.addf %16, %18 : vector<8x8xf32>
    %c0_17 = arith.constant 0 : index
    %c0_18 = arith.constant 0 : index
    %20 = vector.load %arg8[%c0_17, %c0_18] : memref<8x8xf32, #tpu.memory_space<vmem>>, vector<8x8xf32>
    tpu.vector_store %arg8[%c0_17, %c0_18], %19 {strides = array<i32>} : memref<8x8xf32, #tpu.memory_space<vmem>>, vector<8x8xf32>,
    return
  }
  func.func @transform_0(%arg0: i32) -> (i32, i32) {
    %c0_i32 = arith.constant 0 : i32
    %c0_i32_0 = arith.constant 0 : i32
    return %arg0, %c0_i32 : i32, i32
  }
  func.func @transform_1(%arg0: i32) -> (i32, i32) {
    %c0_i32 = arith.constant 0 : i32
    %c0_i32_0 = arith.constant 0 : i32
    %c0_i32_1 = arith.constant 0 : i32
    return %c0_i32, %c0_i32_0 : i32, i32
  }
  func.func @transform_2(%arg0: i32) -> (i32, i32) {
    %c0_i32 = arith.constant 0 : i32
    %c0_i32_0 = arith.constant 0 : i32
    %c0_i32_1 = arith.constant 0 : i32
    return %c0_i32, %c0_i32_0 : i32, i32
  }
  func.func @transform_3(%arg0: i32) -> (i32, i32) {
    %c0_i32 = arith.constant 0 : i32
    %c0_i32_0 = arith.constant 0 : i32
    %c0_i32_1 = arith.constant 0 : i32
    return %c0_i32, %c0_i32_0 : i32, i32
  }
  func.func @transform_4(%arg0: i32) -> (i32, i32) {
    %c0_i32 = arith.constant 0 : i32
    %c0_i32_0 = arith.constant 0 : i32
    %c0_i32_1 = arith.constant 0 : i32
    return %c0_i32, %c0_i32_0 : i32, i32
  }
  func.func @transform_5(%arg0: i32) -> (i32, i32) {
    %c0_i32 = arith.constant 0 : i32
    %c0_i32_0 = arith.constant 0 : i32
    %c0_i32_1 = arith.constant 0 : i32
    return %c0_i32, %c0_i32_0 : i32, i32
  }
  func.func @transform_6(%arg0: i32) -> (i32, i32) {
    %c0_i32 = arith.constant 0 : i32
    %c0_i32_0 = arith.constant 0 : i32
    %c0_i32_1 = arith.constant 0 : i32
    return %c0_i32, %c0_i32_0 : i32, i32
  }
  func.func @transform_7(%arg0: i32) -> (i32, i32) {
    %c0_i32 = arith.constant 0 : i32
    %c0_i32_0 = arith.constant 0 : i32
    return %c0_i32, %arg0 : i32, i32
  }
}

</mosaic_0001>

<llo_original>
// kernel: tpu_custom_call.1
$region0: #{tpu_custom_call.1}
  #allocation0 [shape = 'u32[]', space=smem, size = 0x4, offset = 0x4, fixed_abs, tag = 'smem constant byte address 0x4 - core index']
  #allocation1 [shape = 'u32[144,128]{1,0:T(1,128)}', space=vmem, size = 0x12000, scoped, tag = 'internal scratch']
  %s0 = inlined_call_operand.vmem [shape: f32[8,5], index: 0, kind: input, shape index: {}]
  %s1 = inlined_call_operand.hbm [shape: f32[5,32], index: 1, kind: input, shape index: {}]
  %s2 = inlined_call_operand.hbm [shape: f32[1,32], index: 2, kind: input, shape index: {}]
  %s3 = inlined_call_operand.hbm [shape: f32[32,32], index: 3, kind: input, shape index: {}]
  %s4 = inlined_call_operand.vmem [shape: f32[1,32], index: 4, kind: input, shape index: {}]
  %s5 = inlined_call_operand.vmem [shape: f32[8,32], index: 5, kind: input, shape index: {}]
  %s6 = inlined_call_operand.vmem [shape: f32[8,1], index: 6, kind: input, shape index: {}]
  %s7 = inlined_call_operand.hbm [shape: f32[8,8], index: 7, kind: output, shape index: {}]
  %s8 = sld [smem:[#allocation0]]
  $region50: #{tpu_custom_call.1} parent=0
    _
  %s10 = ssub.s32 1, %s8
  %s11 = scalar_select 0, %s10, %s8
  $region1: #{tpu_custom_call.1} parent=0
    #allocation2 [shape = 'u8[4096]{0}', space=vmem, size = 0x1000, scoped, tag = 'input window, operand 1, single buffered']
    #allocation3 [shape = 's32[1]{0}', space=sflag, size = 0x4, scoped, tag = 'scoped memory for tpu_custom_call.1']
    #allocation4 [shape = 's32[1]{0}', space=sflag, size = 0x4, scoped, tag = 'scoped memory for tpu_custom_call.1']
    #allocation5 [shape = 'u8[512]{0}', space=vmem, size = 0x400, scoped, tag = 'input window, operand 2, single buffered']
    #allocation6 [shape = 's32[1]{0}', space=sflag, size = 0x4, scoped, tag = 'scoped memory for tpu_custom_call.1']
    #allocation7 [shape = 'u8[16384]{0}', space=vmem, size = 0x4000, scoped, tag = 'input window, operand 3, single buffered']
    #allocation8 [shape = 'u8[4096]{0}', space=vmem, size = 0x1000, scoped, tag = 'output window, operand 0, single buffered']
    %12 = vsyncpa [#allocation3], 0
    %13 = vsyncpa [#allocation6], 0
    %14 = vsyncpa [#allocation4], 0
    // Predicated region
    $region2: #{tpu_custom_call.1} parent=1 // pred_check
      _
    $region3: #{tpu_custom_call.1} parent=1 // pred_check_branch
      %16 = sbr.rel (0) target = $region5
    $region4: #{tpu_custom_call.1} parent=1 // pred_region
      _
    $region5: #{tpu_custom_call.1} parent=1 // pred_fallthru
      _
    // Predicated region
    $region6: #{tpu_custom_call.1} parent=1 // pred_check
      _
    $region7: #{tpu_custom_call.1} parent=1 // pred_check_branch
      %18 = sbr.rel (0) target = $region9
    $region8: #{tpu_custom_call.1} parent=1 // pred_region
      %s20 = ssub.s32 128, 128
      %21 = vsyncadd [#allocation3], %s20
      %s23 = sshll.u32 [#allocation2], 4
      %s24 = int_to_ptr.vmem [resolvable:$true] %s23
      %26 = dma.hbm_to_vmem [thread:$0]  %s1, 128, %s24, [#allocation3]
    $region9: #{tpu_custom_call.1} parent=1 // pred_fallthru
      _
    // Predicated region
    $region10: #{tpu_custom_call.1} parent=1 // pred_check
      _
    $region11: #{tpu_custom_call.1} parent=1 // pred_check_branch
      %28 = sbr.rel (0) target = $region13
    $region12: #{tpu_custom_call.1} parent=1 // pred_region
      %s30 = ssub.s32 16, 16
      %31 = vsyncadd [#allocation6], %s30
      %s33 = sshll.u32 [#allocation5], 4
      %s34 = int_to_ptr.vmem [resolvable:$true] %s33
      %36 = dma.hbm_to_vmem [thread:$0]  %s2, 16, %s34, [#allocation6]
    $region13: #{tpu_custom_call.1} parent=1 // pred_fallthru
      _
    // Predicated region
    $region14: #{tpu_custom_call.1} parent=1 // pred_check
      _
    $region15: #{tpu_custom_call.1} parent=1 // pred_check_branch
      %38 = sbr.rel (0) target = $region17
    $region16: #{tpu_custom_call.1} parent=1 // pred_region
      %s40 = ssub.s32 512, 512
      %41 = vsyncadd [#allocation6], %s40
      %s42 = sshll.u32 [#allocation7], 4
      %s43 = int_to_ptr.vmem [resolvable:$true] %s42
      %48 = dma.hbm_to_vmem [thread:$0]  %s3, 512, %s43, [#allocation6], 128, 128, 8
    $region17: #{tpu_custom_call.1} parent=1 // pred_fallthru
      _
    // Predicated region
    $region18: #{tpu_custom_call.1} parent=1 // pred_check
      _
    $region19: #{tpu_custom_call.1} parent=1 // pred_check_branch
      %50 = sbr.rel (0) target = $region21
    $region20: #{tpu_custom_call.1} parent=1 // pred_region
      _
    $region21: #{tpu_custom_call.1} parent=1 // pred_fallthru
      _
    // Predicated region
    $region22: #{tpu_custom_call.1} parent=1 // pred_check
      _
    $region23: #{tpu_custom_call.1} parent=1 // pred_check_branch
      %52 = sbr.rel (0) target = $region25
    $region24: #{tpu_custom_call.1} parent=1 // pred_region
      _
    $region25: #{tpu_custom_call.1} parent=1 // pred_fallthru
      _
    // Predicated region
    $region26: #{tpu_custom_call.1} parent=1 // pred_check
      _
    $region27: #{tpu_custom_call.1} parent=1 // pred_check_branch
      %54 = sbr.rel (0) target = $region29
    $region28: #{tpu_custom_call.1} parent=1 // pred_region
      _
    $region29: #{tpu_custom_call.1} parent=1 // pred_fallthru
      _
    // Predicated region
    $region30: #{tpu_custom_call.1} parent=1 // pred_check
      _
    $region31: #{tpu_custom_call.1} parent=1 // pred_check_branch
      %56 = sbr.rel (0) target = $region33
    $region32: #{tpu_custom_call.1} parent=1 // pred_region
      %57 = dma.done [#allocation3], 128
    $region33: #{tpu_custom_call.1} parent=1 // pred_fallthru
      _
    // Predicated region
    $region34: #{tpu_custom_call.1} parent=1 // pred_check
      _
    $region35: #{tpu_custom_call.1} parent=1 // pred_check_branch
      %59 = sbr.rel (0) target = $region37
    $region36: #{tpu_custom_call.1} parent=1 // pred_region
      %60 = dma.done [#allocation6], 16
    $region37: #{tpu_custom_call.1} parent=1 // pred_fallthru
      _
    // Predicated region
    $region38: #{tpu_custom_call.1} parent=1 // pred_check
      _
    $region39: #{tpu_custom_call.1} parent=1 // pred_check_branch
      %62 = sbr.rel (0) target = $region41
    $region40: #{tpu_custom_call.1} parent=1 // pred_region
      %63 = dma.done [#allocation6], 512
    $region41: #{tpu_custom_call.1} parent=1 // pred_fallthru
      _
    %v64 = vld [vmem:[%s0] sm:$0xff]
    %v65 = vld [vmem:[#allocation2] sm:$0x1f]
    %v66 = vld [vmem:[#allocation5] sm:$0x1]
    %v68 = vlaneseq
    %v69 = vshrl.u32 %v68, 7
    %v70 = vsub.s32 0, %v69
    %v71 = vrot.slane %v66, %v70
    %vm73 = vcmask 39936
    %v75 = vsel %vm73, %v64, 0
    %vm77 = vcmask 1044480
    %v79 = vsel %vm77, %v65, 0
    %81 = vmatprep.subr.mxu0 0.0
    %82 = vmatpush1.msra.mxu0 %v79
    %83 = vmatprep.subr.mxu0 0.0
    %84 = vmatpush1.msra.mxu0 0.0
    %85 = vmatprep.subr.mxu0 0.0
    %86 = vmatpush1.msra.mxu0 0.0
    %87 = vmatprep.subr.mxu0 0.0
    %88 = vmatpush1.msra.mxu0 0.0
    %89 = vmatprep.subr.mxu0 0.0
    %90 = vmatpush1.msra.mxu0 0.0
    %91 = vmatprep.subr.mxu0 0.0
    %92 = vmatpush1.msra.mxu0 0.0
    %93 = vmatprep.subr.mxu0 0.0
    %94 = vmatpush1.msra.mxu0 0.0
    %95 = vmatprep.subr.mxu0 0.0
    %96 = vmatpush1.msra.mxu0 0.0
    %97 = vmatprep.subr.mxu0 0.0
    %98 = vmatpush1.msra.mxu0 0.0
    %99 = vmatprep.subr.mxu0 0.0
    %100 = vmatpush1.msra.mxu0 0.0
    %101 = vmatprep.subr.mxu0 0.0
    %102 = vmatpush1.msra.mxu0 0.0
    %103 = vmatprep.subr.mxu0 0.0
    %104 = vmatpush1.msra.mxu0 0.0
    %105 = vmatprep.subr.mxu0 0.0
    %106 = vmatpush1.msra.mxu0 0.0
    %107 = vmatprep.subr.mxu0 0.0
    %108 = vmatpush1.msra.mxu0 0.0
    %109 = vmatprep.subr.mxu0 0.0
    %110 = vmatpush1.msra.mxu0 0.0
    %111 = vmatprep.subr.mxu0 0.0
    %112 = vmatpush1.msra.mxu0 0.0
    %113 = vmatprep.subr.mxu0 0.0
    %114 = vmatpush1.msra.mxu0 0.0
    %115 = vmatprep.subr.mxu0 0.0
    %116 = vmatpush1.msra.mxu0 0.0
    %117 = vmatprep.subr.mxu0 0.0
    %118 = vmatpush1.msra.mxu0 0.0
    %119 = vmatprep.subr.mxu0 0.0
    %120 = vmatpush1.msra.mxu0 0.0
    %121 = vmatprep.subr.mxu0 0.0
    %122 = vmatpush1.msra.mxu0 0.0
    %123 = vmatprep.subr.mxu0 0.0
    %124 = vmatpush1.msra.mxu0 0.0
    %125 = vmatprep.subr.mxu0 0.0
    %126 = vmatpush1.msra.mxu0 0.0
    %127 = vmatprep.subr.mxu0 0.0
    %128 = vmatpush1.msra.mxu0 0.0
    %129 = vmatprep.subr.mxu0 0.0
    %130 = vmatpush1.msra.mxu0 0.0
    %131 = vmatprep.subr.mxu0 0.0
    %132 = vmatpush1.msra.mxu0 0.0
    %133 = vmatprep.subr.mxu0 0.0
    %134 = vmatpush1.msra.mxu0 0.0
    %135 = vmatprep.subr.mxu0 0.0
    %136 = vmatpush1.msra.mxu0 0.0
    %137 = vmatprep.subr.mxu0 0.0
    %138 = vmatpush1.msra.mxu0 0.0
    %139 = vmatprep.subr.mxu0 0.0
    %140 = vmatpush1.msra.mxu0 0.0
    %141 = vmatprep.subr.mxu0 0.0
    %142 = vmatpush1.msra.mxu0 0.0
    %143 = vmatprep.subr.mxu0 0.0
    %144 = vmatpush1.msra.mxu0 0.0
    %145 = vmatprep.mubr.f32.mxu0 0.0
    %146 = vmatmul.mubr.f32.gmra.mrb[0].mxu0 %v75
    %v147 = vpop.f32.mrb[0].mxu0
    %v148 = vadd.f32 %v71, %v147
    %v149 = vpop.f32.mrb[0].mxu0
    %150 = vdwg.mxu0
    %v151 = vmax.f32 %v148, 0.0
    %v152 = vld [vmem:[#allocation7] sm:$0xff]
    %v153 = vld [vmem:[#allocation7 + $0x8] sm:$0xff]
    %v154 = vld [vmem:[#allocation7 + $0x10] sm:$0xff]
    %v155 = vld [vmem:[#allocation7 + $0x18] sm:$0xff]
    %v156 = vld [vmem:[%s4] sm:$0x1]
    %v158 = vlaneseq
    %v159 = vshrl.u32 %v158, 7
    %v160 = vsub.s32 0, %v159
    %v161 = vrot.slane %v156, %v160
    %vm163 = vcmask 261120
    %v165 = vsel %vm163, %v151, 0
    %167 = vmatprep.subr.mxu0 0.0
    %168 = vmatpush1.msra.mxu0 %v152
    %169 = vmatprep.subr.mxu0 0.0
    %170 = vmatpush1.msra.mxu0 %v153
    %171 = vmatprep.subr.mxu0 0.0
    %172 = vmatpush1.msra.mxu0 %v154
    %173 = vmatprep.subr.mxu0 0.0
    %174 = vmatpush1.msra.mxu0 %v155
    %175 = vmatprep.subr.mxu0 0.0
    %176 = vmatpush1.msra.mxu0 0.0
    %177 = vmatprep.subr.mxu0 0.0
    %178 = vmatpush1.msra.mxu0 0.0
    %179 = vmatprep.subr.mxu0 0.0
    %180 = vmatpush1.msra.mxu0 0.0
    %181 = vmatprep.subr.mxu0 0.0
    %182 = vmatpush1.msra.mxu0 0.0
    %183 = vmatprep.subr.mxu0 0.0
    %184 = vmatpush1.msra.mxu0 0.0
    %185 = vmatprep.subr.mxu0 0.0
    %186 = vmatpush1.msra.mxu0 0.0
    %187 = vmatprep.subr.mxu0 0.0
    %188 = vmatpush1.msra.mxu0 0.0
    %189 = vmatprep.subr.mxu0 0.0
    %190 = vmatpush1.msra.mxu0 0.0
    %191 = vmatprep.subr.mxu0 0.0
    %192 = vmatpush1.msra.mxu0 0.0
    %193 = vmatprep.subr.mxu0 0.0
    %194 = vmatpush1.msra.mxu0 0.0
    %195 = vmatprep.subr.mxu0 0.0
    %196 = vmatpush1.msra.mxu0 0.0
    %197 = vmatprep.subr.mxu0 0.0
    %198 = vmatpush1.msra.mxu0 0.0
    %199 = vmatprep.subr.mxu0 0.0
    %200 = vmatpush1.msra.mxu0 0.0
    %201 = vmatprep.subr.mxu0 0.0
    %202 = vmatpush1.msra.mxu0 0.0
    %203 = vmatprep.subr.mxu0 0.0
    %204 = vmatpush1.msra.mxu0 0.0
    %205 = vmatprep.subr.mxu0 0.0
    %206 = vmatpush1.msra.mxu0 0.0
    %207 = vmatprep.subr.mxu0 0.0
    %208 = vmatpush1.msra.mxu0 0.0
    %209 = vmatprep.subr.mxu0 0.0
    %210 = vmatpush1.msra.mxu0 0.0
    %211 = vmatprep.subr.mxu0 0.0
    %212 = vmatpush1.msra.mxu0 0.0
    %213 = vmatprep.subr.mxu0 0.0
    %214 = vmatpush1.msra.mxu0 0.0
    %215 = vmatprep.subr.mxu0 0.0
    %216 = vmatpush1.msra.mxu0 0.0
    %217 = vmatprep.subr.mxu0 0.0
    %218 = vmatpush1.msra.mxu0 0.0
    %219 = vmatprep.subr.mxu0 0.0
    %220 = vmatpush1.msra.mxu0 0.0
    %221 = vmatprep.subr.mxu0 0.0
    %222 = vmatpush1.msra.mxu0 0.0
    %223 = vmatprep.subr.mxu0 0.0
    %224 = vmatpush1.msra.mxu0 0.0
    %225 = vmatprep.subr.mxu0 0.0
    %226 = vmatpush1.msra.mxu0 0.0
    %227 = vmatprep.subr.mxu0 0.0
    %228 = vmatpush1.msra.mxu0 0.0
    %229 = vmatprep.subr.mxu0 0.0
    %230 = vmatpush1.msra.mxu0 0.0
    %231 = vmatprep.mubr.f32.mxu0 0.0
    %232 = vmatmul.mubr.f32.gmra.mrb[0].mxu0 %v165
    %v233 = vpop.f32.mrb[0].mxu0
    %v234 = vadd.f32 %v161, %v233
    %v235 = vpop.f32.mrb[0].mxu0
    %236 = vdwg.mxu0
    %v237 = vmax.f32 %v234, 0.0
    %v238 = vld [vmem:[%s5] sm:$0xff]
    %v239 = vld [vmem:[%s6] sm:$0xff]
    %241 = vset.pattern.permute.xlu0 0
    %242 = vperm.xlu0 %241, %v239
    %v243 = vpop.permute.xlu0 %242
    %v246 = vsel %vm163, %v238, 0
    %v249 = vsel %vm163, %v237, 0
    %251 = vmatprep.subr.mxu0 0.0
    %252 = vmatpush1.xpose.msra.mxu0 %v249
    %253 = vmatprep.subr.mxu0 0.0
    %254 = vmatpush1.xpose.msra.mxu0 0.0
    %255 = vmatprep.subr.mxu0 0.0
    %256 = vmatpush1.xpose.msra.mxu0 0.0
    %257 = vmatprep.subr.mxu0 0.0
    %258 = vmatpush1.xpose.msra.mxu0 0.0
    %259 = vmatprep.subr.mxu0 0.0
    %260 = vmatpush1.xpose.msra.mxu0 0.0
    %261 = vmatprep.subr.mxu0 0.0
    %262 = vmatpush1.xpose.msra.mxu0 0.0
    %263 = vmatprep.subr.mxu0 0.0
    %264 = vmatpush1.xpose.msra.mxu0 0.0
    %265 = vmatprep.subr.mxu0 0.0
    %266 = vmatpush1.xpose.msra.mxu0 0.0
    %267 = vmatprep.subr.mxu0 0.0
    %268 = vmatpush1.xpose.msra.mxu0 0.0
    %269 = vmatprep.subr.mxu0 0.0
    %270 = vmatpush1.xpose.msra.mxu0 0.0
    %271 = vmatprep.subr.mxu0 0.0
    %272 = vmatpush1.xpose.msra.mxu0 0.0
    %273 = vmatprep.subr.mxu0 0.0
    %274 = vmatpush1.xpose.msra.mxu0 0.0
    %275 = vmatprep.subr.mxu0 0.0
    %276 = vmatpush1.xpose.msra.mxu0 0.0
    %277 = vmatprep.subr.mxu0 0.0
    %278 = vmatpush1.xpose.msra.mxu0 0.0
    %279 = vmatprep.subr.mxu0 0.0
    %280 = vmatpush1.xpose.msra.mxu0 0.0
    %281 = vmatprep.subr.mxu0 0.0
    %282 = vmatpush1.xpose.msra.mxu0 0.0
    %283 = vmatprep.subr.mxu0 0.0
    %284 = vmatpush1.xpose.msra.mxu0 0.0
    %285 = vmatprep.subr.mxu0 0.0
    %286 = vmatpush1.xpose.msra.mxu0 0.0
    %287 = vmatprep.subr.mxu0 0.0
    %288 = vmatpush1.xpose.msra.mxu0 0.0
    %289 = vmatprep.subr.mxu0 0.0
    %290 = vmatpush1.xpose.msra.mxu0 0.0
    %291 = vmatprep.subr.mxu0 0.0
    %292 = vmatpush1.xpose.msra.mxu0 0.0
    %293 = vmatprep.subr.mxu0 0.0
    %294 = vmatpush1.xpose.msra.mxu0 0.0
    %295 = vmatprep.subr.mxu0 0.0
    %296 = vmatpush1.xpose.msra.mxu0 0.0
    %297 = vmatprep.subr.mxu0 0.0
    %298 = vmatpush1.xpose.msra.mxu0 0.0
    %299 = vmatprep.subr.mxu0 0.0
    %300 = vmatpush1.xpose.msra.mxu0 0.0
    %301 = vmatprep.subr.mxu0 0.0
    %302 = vmatpush1.xpose.msra.mxu0 0.0
    %303 = vmatprep.subr.mxu0 0.0
    %304 = vmatpush1.xpose.msra.mxu0 0.0
    %305 = vmatprep.subr.mxu0 0.0
    %306 = vmatpush1.xpose.msra.mxu0 0.0
    %307 = vmatprep.subr.mxu0 0.0
    %308 = vmatpush1.xpose.msra.mxu0 0.0
    %309 = vmatprep.subr.mxu0 0.0
    %310 = vmatpush1.xpose.msra.mxu0 0.0
    %311 = vmatprep.subr.mxu0 0.0
    %312 = vmatpush1.xpose.msra.mxu0 0.0
    %313 = vmatprep.subr.mxu0 0.0
    %314 = vmatpush1.xpose.msra.mxu0 0.0
    %315 = vmatprep.mubr.f32.mxu0 0.0
    %316 = vmatmul.mubr.f32.gmra.mrb[0].mxu0 %v246
    %v317 = vpop.f32.mrb[0].mxu0
    %v318 = vadd.f32 %v243, %v317
    %v319 = vpop.f32.mrb[0].mxu0
    %320 = vdwg.mxu0
    %vm321 = vcmask 64512
    %322 = vst.msk [vmem:[#allocation8] sm:$0xff] %vm321, %v318
    // Predicated region
    $region42: #{tpu_custom_call.1} parent=1 // pred_check
      _
    $region43: #{tpu_custom_call.1} parent=1 // pred_check_branch
      %324 = sbr.rel (0) target = $region45
    $region44: #{tpu_custom_call.1} parent=1 // pred_region
      %s326 = ssub.s32 128, 128
      %327 = vsyncadd [#allocation4], %s326
      %s329 = sshll.u32 [#allocation8], 4
      %s330 = int_to_ptr.vmem [resolvable:$true] %s329
      %332 = dma.vmem_to_hbm [thread:$0]  %s330, 128, %s7, [#allocation4]
    $region45: #{tpu_custom_call.1} parent=1 // pred_fallthru
      _
    // Predicated region
    $region46: #{tpu_custom_call.1} parent=1 // pred_check
      _
    $region47: #{tpu_custom_call.1} parent=1 // pred_check_branch
      %334 = sbr.rel (0) target = $region49
    $region48: #{tpu_custom_call.1} parent=1 // pred_region
      %335 = dma.done [#allocation4], 128
    $region49: #{tpu_custom_call.1} parent=1 // pred_fallthru
      _
    %336 = vsyncpa [#allocation3], 1
    %337 = vsyncpa [#allocation6], 1
    %338 = vsyncpa [#allocation4], 1

</llo_original>
